<compile_context>
chip_gen: v6e
topology: v6e:2x2x1
jax: 0.10.0
libtpu: 0.0.40
codegen_flags: <defaults>
</compile_context>

<pallas_src>
import math

import jax
import jax.numpy as jnp
from jax.experimental import pallas as pl
from jax.experimental.pallas import tpu as pltpu

_LANES = 128
_ROW_ALIGN = 16        # rows multiple of 16 -> each Box-Muller half is 8-sublane aligned
_MAX_TILE_R = 2048     # (2048, 128) f32 = 1 MiB per buffer: fits v5e/v6e/v7x scoped VMEM


def _hash_u32(x):
    """lowbias32 integer hash (well-mixed 32-bit avalanche), pure VPU ops."""
    x = x ^ (x >> 16)
    x = x * jnp.uint32(0x7FEB352D)
    x = x ^ (x >> 15)
    x = x * jnp.uint32(0x846CA68B)
    x = x ^ (x >> 16)
    return x


def _gaussian_noise_kernel(seed_ref, mean_ref, std_ref, x_ref, o_ref):
    """seed/mean/std are SMEM scalars; x/o are (TILE_R, 128) VMEM tiles."""
    tile_r, lanes = x_ref.shape
    half = tile_r // 2

    # Hoist scalar reads / broadcasts once per tile.
    mean = mean_ref[0]
    std = std_ref[0]
    seed = seed_ref[0].astype(jnp.uint32)

    # Unique per-element counter: (tile, half-row, lane) -> one u32.
    base = pl.program_id(0) * (half * lanes)
    rows_i = jax.lax.broadcasted_iota(jnp.int32, (half, lanes), 0)
    cols_i = jax.lax.broadcasted_iota(jnp.int32, (half, lanes), 1)
    ctr = (base + rows_i * lanes + cols_i).astype(jnp.uint32)

    # Two independent uniform streams from the counter + seed.
    state = ctr * jnp.uint32(0x9E3779B9) + seed * jnp.uint32(0x85EBCA6B)
    b1 = _hash_u32(state)
    b2 = _hash_u32(state ^ jnp.uint32(0x5BD1E995))

    # Top 24 bits -> uniforms. u1 in (0, 1] (log-safe), u2 in [0, 1).
    inv24 = jnp.float32(1.0 / 16777216.0)
    u1 = ((b1 >> 8).astype(jnp.int32).astype(jnp.float32) + jnp.float32(1.0)) * inv24
    u2 = (b2 >> 8).astype(jnp.int32).astype(jnp.float32) * inv24

    # Box-Muller: use BOTH outputs (cos half + sin half of the tile).
    r = jnp.sqrt(jnp.float32(-2.0) * jnp.log(u1))
    theta = jnp.float32(2.0 * math.pi) * u2
    z = jnp.concatenate([r * jnp.cos(theta), r * jnp.sin(theta)], axis=0)

    noisy = x_ref[...] + z * std + mean
    o_ref[...] = jnp.clip(noisy, jnp.float32(0.0), jnp.float32(1.0))


@jax.jit
def gaussian_noise(img, mean, std, seed):
    """img: float NCHW (any shape; elementwise). mean/std: scalars. seed: int."""
    orig_shape = img.shape
    orig_dtype = img.dtype
    n = img.size

    flat = img.reshape(-1).astype(jnp.float32)

    # Only pad if the element count is not already (16*128)-aligned.
    pad_to = _ROW_ALIGN * _LANES
    n_pad = (-n) % pad_to
    if n_pad:
        flat = jnp.pad(flat, (0, n_pad))
    x2d = flat.reshape(-1, _LANES)
    rows = x2d.shape[0]

    tile_r = min(_MAX_TILE_R, rows)           # multiple of 16 by construction
    grid = (pl.cdiv(rows, tile_r),)

    seed_arr = jnp.asarray([seed], dtype=jnp.int32)
    mean_arr = jnp.asarray([mean], dtype=jnp.float32)
    std_arr = jnp.asarray([std], dtype=jnp.float32)

    total = rows * _LANES
    cost = pl.CostEstimate(
        flops=40 * total,                     # hash + Box-Muller arithmetic
        transcendentals=2 * total,            # log/sqrt/cos/sin per pair
        bytes_accessed=8 * total,             # read + write f32
    )

    out2d = pl.pallas_call(
        _gaussian_noise_kernel,
        out_shape=jax.ShapeDtypeStruct((rows, _LANES), jnp.float32),
        grid=grid,
        in_specs=[
            pl.BlockSpec(memory_space=pltpu.MemorySpace.SMEM),   # seed
            pl.BlockSpec(memory_space=pltpu.MemorySpace.SMEM),   # mean
            pl.BlockSpec(memory_space=pltpu.MemorySpace.SMEM),   # std
            pl.BlockSpec((tile_r, _LANES), lambda i: (i, 0)),    # img slab
        ],
        out_specs=pl.BlockSpec((tile_r, _LANES), lambda i: (i, 0)),
        compiler_params=pltpu.CompilerParams(
            dimension_semantics=("parallel",),
        ),
        cost_estimate=cost,
    )(seed_arr, mean_arr, std_arr, x2d)

    if n_pad:
        out = out2d.reshape(-1)[:n].reshape(orig_shape)
    else:
        out = out2d.reshape(orig_shape)
    return out.astype(orig_dtype)


if __name__ == "__main__":
    key = jax.random.PRNGKey(0)
    # Small image batch consistent with the module's intended use (NCHW).
    img = jax.random.uniform(key, (2, 4, 16, 16), dtype=jnp.float32)

    mean = 0.0
    std = 0.1
    seed = 1234  # deterministic stateless in-kernel RNG seed

    out = gaussian_noise(img, mean, std, seed)
    out = jax.block_until_ready(out)

    # Sanity checks: same shape/dtype, clamped to [0, 1], noise actually applied.
    assert out.shape == img.shape and out.dtype == img.dtype
    assert float(jnp.min(out)) >= 0.0 and float(jnp.max(out)) <= 1.0
    assert float(jnp.max(jnp.abs(out - jnp.clip(img, 0.0, 1.0)))) > 0.0

    print("KERNEL_OK")
</pallas_src>

<mosaic_0001>
module attributes {stable_mosaic.version = 11 : i64} {
  func.func @_gaussian_noise_kernel(%arg0: i32, %arg1: memref<1xi32, #tpu.memory_space<smem>>, %arg2: memref<1xf32, #tpu.memory_space<smem>>, %arg3: memref<1xf32, #tpu.memory_space<smem>>, %arg4: memref<16x128xf32, #tpu.memory_space<vmem>>, %arg5: memref<16x128xf32, #tpu.memory_space<vmem>>) attributes {dimension_semantics = [#tpu.dimension_semantics<parallel>], iteration_bounds = array<i64: 1>, scalar_prefetch = 0 : i64, scratch_operands = 0 : i64, tpu.core_type = #tpu.core_type<tc>, window_params = [{transform_indices = @transform_0, window_bounds = array<i64: 1>}, {transform_indices = @transform_1, window_bounds = array<i64: 1>}, {transform_indices = @transform_2, window_bounds = array<i64: 1>}, {transform_indices = @transform_3, window_bounds = array<i64: 16, 128>}, {transform_indices = @transform_4, window_bounds = array<i64: 16, 128>}]} {
    %c0 = arith.constant 0 : index
    %0 = memref.load %arg2[%c0] : memref<1xf32, #tpu.memory_space<smem>>
    %c0_0 = arith.constant 0 : index
    %1 = memref.load %arg3[%c0_0] : memref<1xf32, #tpu.memory_space<smem>>
    %c0_1 = arith.constant 0 : index
    %2 = memref.load %arg1[%c0_1] : memref<1xi32, #tpu.memory_space<smem>>
    %c1024_i32 = arith.constant 1024 : i32
    %3 = arith.muli %arg0, %c1024_i32 : i32
    %4 = tpu.iota {dimensions = array<i32: 0>} : vector<8x128xi32>
    %5 = tpu.iota {dimensions = array<i32: 1>} : vector<8x128xi32>
    %c128_i32 = arith.constant 128 : i32
    %6 = vector.broadcast %c128_i32 : i32 to vector<8x128xi32>
    %7 = arith.muli %4, %6 : vector<8x128xi32>
    %8 = vector.broadcast %3 : i32 to vector<8x128xi32>
    %9 = arith.addi %8, %7 : vector<8x128xi32>
    %10 = arith.addi %9, %5 : vector<8x128xi32>
    %c-1640531527_i32 = arith.constant -1640531527 : i32
    %11 = vector.broadcast %c-1640531527_i32 : i32 to vector<8x128xi32>
    %12 = arith.muli %10, %11 : vector<8x128xi32>
    %c-2048144789_i32 = arith.constant -2048144789 : i32
    %13 = arith.muli %2, %c-2048144789_i32 : i32
    %14 = vector.broadcast %13 : i32 to vector<8x128xi32>
    %15 = arith.addi %12, %14 : vector<8x128xi32>
    %c16_i32 = arith.constant 16 : i32
    %16 = vector.broadcast %c16_i32 : i32 to vector<8x128xi32>
    %17 = arith.shrui %15, %16 : vector<8x128xi32>
    %18 = arith.xori %15, %17 : vector<8x128xi32>
    %c2146121005_i32 = arith.constant 2146121005 : i32
    %19 = vector.broadcast %c2146121005_i32 : i32 to vector<8x128xi32>
    %20 = arith.muli %18, %19 : vector<8x128xi32>
    %c15_i32 = arith.constant 15 : i32
    %21 = vector.broadcast %c15_i32 : i32 to vector<8x128xi32>
    %22 = arith.shrui %20, %21 : vector<8x128xi32>
    %23 = arith.xori %20, %22 : vector<8x128xi32>
    %c-2073254261_i32 = arith.constant -2073254261 : i32
    %24 = vector.broadcast %c-2073254261_i32 : i32 to vector<8x128xi32>
    %25 = arith.muli %23, %24 : vector<8x128xi32>
    %c16_i32_2 = arith.constant 16 : i32
    %26 = vector.broadcast %c16_i32_2 : i32 to vector<8x128xi32>
    %27 = arith.shrui %25, %26 : vector<8x128xi32>
    %28 = arith.xori %25, %27 : vector<8x128xi32>
    %c1540483477_i32 = arith.constant 1540483477 : i32
    %29 = vector.broadcast %c1540483477_i32 : i32 to vector<8x128xi32>
    %30 = arith.xori %15, %29 : vector<8x128xi32>
    %c16_i32_3 = arith.constant 16 : i32
    %31 = vector.broadcast %c16_i32_3 : i32 to vector<8x128xi32>
    %32 = arith.shrui %30, %31 : vector<8x128xi32>
    %33 = arith.xori %30, %32 : vector<8x128xi32>
    %c2146121005_i32_4 = arith.constant 2146121005 : i32
    %34 = vector.broadcast %c2146121005_i32_4 : i32 to vector<8x128xi32>
    %35 = arith.muli %33, %34 : vector<8x128xi32>
    %c15_i32_5 = arith.constant 15 : i32
    %36 = vector.broadcast %c15_i32_5 : i32 to vector<8x128xi32>
    %37 = arith.shrui %35, %36 : vector<8x128xi32>
    %38 = arith.xori %35, %37 : vector<8x128xi32>
    %c-2073254261_i32_6 = arith.constant -2073254261 : i32
    %39 = vector.broadcast %c-2073254261_i32_6 : i32 to vector<8x128xi32>
    %40 = arith.muli %38, %39 : vector<8x128xi32>
    %c16_i32_7 = arith.constant 16 : i32
    %41 = vector.broadcast %c16_i32_7 : i32 to vector<8x128xi32>
    %42 = arith.shrui %40, %41 : vector<8x128xi32>
    %43 = arith.xori %40, %42 : vector<8x128xi32>
    %c8_i32 = arith.constant 8 : i32
    %44 = vector.broadcast %c8_i32 : i32 to vector<8x128xi32>
    %45 = arith.shrui %28, %44 : vector<8x128xi32>
    %46 = arith.sitofp %45 : vector<8x128xi32> to vector<8x128xf32>
    %cst = arith.constant 1.000000e+00 : f32
    %47 = vector.broadcast %cst : f32 to vector<8x128xf32>
    %48 = arith.addf %46, %47 : vector<8x128xf32>
    %cst_8 = arith.constant 5.96046448E-8 : f32
    %49 = vector.broadcast %cst_8 : f32 to vector<8x128xf32>
    %50 = arith.mulf %48, %49 : vector<8x128xf32>
    %c8_i32_9 = arith.constant 8 : i32
    %51 = vector.broadcast %c8_i32_9 : i32 to vector<8x128xi32>
    %52 = arith.shrui %43, %51 : vector<8x128xi32>
    %53 = arith.sitofp %52 : vector<8x128xi32> to vector<8x128xf32>
    %cst_10 = arith.constant 5.96046448E-8 : f32
    %54 = vector.broadcast %cst_10 : f32 to vector<8x128xf32>
    %55 = arith.mulf %53, %54 : vector<8x128xf32>
    %56 = math.log %50 : vector<8x128xf32>
    %cst_11 = arith.constant -2.000000e+00 : f32
    %57 = vector.broadcast %cst_11 : f32 to vector<8x128xf32>
    %58 = arith.mulf %57, %56 : vector<8x128xf32>
    %59 = math.sqrt %58 : vector<8x128xf32>
    %cst_12 = arith.constant 6.28318548 : f32
    %60 = vector.broadcast %cst_12 : f32 to vector<8x128xf32>
    %61 = arith.mulf %60, %55 : vector<8x128xf32>
    %62 = math.cos %61 : vector<8x128xf32>
    %63 = arith.mulf %59, %62 : vector<8x128xf32>
    %64 = math.sin %61 : vector<8x128xf32>
    %65 = arith.mulf %59, %64 : vector<8x128xf32>
    %66 = tpu.concatenate %63, %65 in 0 : vector<8x128xf32>, vector<8x128xf32> -> vector<16x128xf32>
    %c0_13 = arith.constant 0 : index
    %c0_14 = arith.constant 0 : index
    %67 = vector.load %arg4[%c0_13, %c0_14] : memref<16x128xf32, #tpu.memory_space<vmem>>, vector<16x128xf32>
    %68 = vector.broadcast %1 : f32 to vector<16x128xf32>
    %69 = arith.mulf %66, %68 : vector<16x128xf32>
    %70 = arith.addf %67, %69 : vector<16x128xf32>
    %71 = vector.broadcast %0 : f32 to vector<16x128xf32>
    %72 = arith.addf %70, %71 : vector<16x128xf32>
    %cst_15 = arith.constant 0.000000e+00 : f32
    %cst_16 = arith.constant 1.000000e+00 : f32
    %73 = vector.broadcast %cst_15 : f32 to vector<16x128xf32>
    %74 = arith.maximumf %73, %72 : vector<16x128xf32>
    %75 = vector.broadcast %cst_16 : f32 to vector<16x128xf32>
    %76 = arith.minimumf %75, %74 : vector<16x128xf32>
    %c0_17 = arith.constant 0 : index
    %c0_18 = arith.constant 0 : index
    %77 = vector.load %arg5[%c0_17, %c0_18] : memref<16x128xf32, #tpu.memory_space<vmem>>, vector<16x128xf32>
    tpu.vector_store %arg5[%c0_17, %c0_18], %76 {strides = array<i32>} : memref<16x128xf32, #tpu.memory_space<vmem>>, vector<16x128xf32>,
    return
  }
  func.func @transform_0(%arg0: i32) -> i32 {
    %c0_i32 = arith.constant 0 : i32
    %c0_i32_0 = arith.constant 0 : i32
    return %c0_i32 : i32
  }
  func.func @transform_1(%arg0: i32) -> i32 {
    %c0_i32 = arith.constant 0 : i32
    %c0_i32_0 = arith.constant 0 : i32
    return %c0_i32 : i32
  }
  func.func @transform_2(%arg0: i32) -> i32 {
    %c0_i32 = arith.constant 0 : i32
    %c0_i32_0 = arith.constant 0 : i32
    return %c0_i32 : i32
  }
  func.func @transform_3(%arg0: i32) -> (i32, i32) {
    %c0_i32 = arith.constant 0 : i32
    %c0_i32_0 = arith.constant 0 : i32
    return %arg0, %c0_i32 : i32, i32
  }
  func.func @transform_4(%arg0: i32) -> (i32, i32) {
    %c0_i32 = arith.constant 0 : i32
    %c0_i32_0 = arith.constant 0 : i32
    return %arg0, %c0_i32 : i32, i32
  }
}

</mosaic_0001>

<llo_original>
// kernel: gaussian_noise.1
$region0: #{gaussian_noise.1}
  #allocation0 [shape = 'u32[]', space=smem, size = 0x4, offset = 0x4, fixed_abs, tag = 'smem constant byte address 0x4 - core index']
  #allocation1 [shape = 'u32[144,128]{1,0:T(1,128)}', space=vmem, size = 0x12000, scoped, tag = 'internal scratch']
  #allocation2 [shape = 's32[1]{0:T(128)S(6)}', space=smem, size = 0x200, scoped, tag = 'scoped memory for gaussian_noise.1']
  #allocation3 [shape = 'f32[1]{0:T(128)S(6)}', space=smem, size = 0x200, scoped, tag = 'scoped memory for gaussian_noise.1']
  #allocation4 [shape = 'f32[1]{0:T(128)S(6)}', space=smem, size = 0x200, scoped, tag = 'scoped memory for gaussian_noise.1']
  %s0 = inlined_call_operand.<no memory space> [shape: s32[1], index: 0, kind: input, shape index: {}]
  %s1 = inlined_call_operand.<no memory space> [shape: f32[1], index: 1, kind: input, shape index: {}]
  %s2 = inlined_call_operand.<no memory space> [shape: f32[1], index: 2, kind: input, shape index: {}]
  %s3 = inlined_call_operand.vmem [shape: f32[16,128], index: 3, kind: input, shape index: {}]
  %s4 = inlined_call_operand.vmem [shape: f32[16,128], index: 4, kind: output, shape index: {}]
  %s5 = sld [smem:[#allocation0]]
  $region26: #{gaussian_noise.1} parent=0
    _
  %s7 = ssub.s32 1, %s5
  %s8 = scalar_select 0, %s7, %s5
  %9 = sst [smem:[#allocation2]] %s0
  %10 = sst [smem:[#allocation3]] %s1
  %11 = sst [smem:[#allocation4]] %s2
  // Predicated region
  $region2: #{gaussian_noise.1} parent=0 // pred_check
    _
  $region3: #{gaussian_noise.1} parent=0 // pred_check_branch
    %13 = sbr.rel (0) target = $region5
  $region4: #{gaussian_noise.1} parent=0 // pred_region
    _
  $region5: #{gaussian_noise.1} parent=0 // pred_fallthru
    _
  // Predicated region
  $region6: #{gaussian_noise.1} parent=0 // pred_check
    _
  $region7: #{gaussian_noise.1} parent=0 // pred_check_branch
    %15 = sbr.rel (0) target = $region9
  $region8: #{gaussian_noise.1} parent=0 // pred_region
    _
  $region9: #{gaussian_noise.1} parent=0 // pred_fallthru
    _
  // Predicated region
  $region10: #{gaussian_noise.1} parent=0 // pred_check
    _
  $region11: #{gaussian_noise.1} parent=0 // pred_check_branch
    %17 = sbr.rel (0) target = $region13
  $region12: #{gaussian_noise.1} parent=0 // pred_region
    _
  $region13: #{gaussian_noise.1} parent=0 // pred_fallthru
    _
  // Predicated region
  $region14: #{gaussian_noise.1} parent=0 // pred_check
    _
  $region15: #{gaussian_noise.1} parent=0 // pred_check_branch
    %19 = sbr.rel (0) target = $region17
  $region16: #{gaussian_noise.1} parent=0 // pred_region
    _
  $region17: #{gaussian_noise.1} parent=0 // pred_fallthru
    _
  %s20 = sld [smem:[#allocation3]]
  %s21 = sld [smem:[#allocation4]]
  %s22 = sld [smem:[#allocation2]]
  %s23 = smul.u32 0, 1024
  %v24 = vlaneseq
  %v25 = vshrl.u32 %v24, 7
  %v26 = vlaneseq
  %v27 = vand.u32 %v26, 127
  %v28 = vmul.u32 %v25, 128
  %v29 = vstv %s23
  %v30 = vadd.s32 %v29, %v28
  %v31 = vadd.s32 %v30, %v27
  %v32 = vmul.u32 %v31, 2654435769
  %s33 = smul.u32 %s22, 2246822507
  %v34 = vstv %s33
  %v35 = vadd.s32 %v32, %v34
  %v36 = vshrl.u32 %v35, 16
  %v37 = vxor.u32 %v35, %v36
  %v38 = vmul.u32 %v37, 2146121005
  %v39 = vshrl.u32 %v38, 15
  %v40 = vxor.u32 %v38, %v39
  %v41 = vmul.u32 %v40, 2221713035
  %v42 = vshrl.u32 %v41, 16
  %v43 = vxor.u32 %v41, %v42
  %v44 = vxor.u32 %v35, 1540483477
  %v45 = vshrl.u32 %v44, 16
  %v46 = vxor.u32 %v44, %v45
  %v47 = vmul.u32 %v46, 2146121005
  %v48 = vshrl.u32 %v47, 15
  %v49 = vxor.u32 %v47, %v48
  %v50 = vmul.u32 %v49, 2221713035
  %v51 = vshrl.u32 %v50, 16
  %v52 = vxor.u32 %v50, %v51
  %v53 = vshrl.u32 %v43, 8
  %v54 = vcvt.s32.f32 %v53
  %v55 = vadd.f32 %v54, 1.0
  %v56 = vmul.f32 %v55, 5.9604645e-08
  %v57 = vshrl.u32 %v52, 8
  %v58 = vcvt.s32.f32 %v57
  %v59 = vmul.f32 %v58, 5.9604645e-08
  %v60 = vlog2.pop %v56
  %v61 = vmul.f32 %v60, 0.6931472
  %v62 = vmul.f32 %v61, -2.0
  %v63 = vrsqrt.pop %v62
  %v64 = vmul.f32 %v62, %v63
  %vm65 = vcmp.eq.f32.partialorder %v62, inf
  %v66 = vsel %vm65, %v62, %v64
  %vm67 = vcmp.eq.f32.partialorder %v62, 0.0
  %v68 = vand.u32 %v62, 2147483648
  %v69 = vsel %vm67, %v68, %v66
  %v70 = vmul.f32 %v59, 6.2831855
  %v71 = vand.u32 2147483647, %v70
  %vm72 = vcmp.le.f32.partialorder %v71, 0.7853982
  %vm73 = vcmp.lt.s32.totalorder %v70, 0
  %v74 = vand.u32 %v70, 2139095040
  %v75 = vshrl.u32 %v74, 23
  %v76 = vsub.s32 %v75, 127
  %v77 = vand.u32 2147483647, %v70
  %v78 = vand.u32 %v77, 8388607
  %v79 = vor.u32 %v78, 8388608
  %v80 = vsub.s32 0, %v79
  %v81 = vadd.s32 %v76, 1
  %vm82 = vcmp.gt.s32.totalorder %v81, 0
  %v83 = vsel %vm82, %v81, 0
  %v84 = vshrl.u32 %v83, 5
  %v85 = vand.u32 %v83, 31
  %v86 = vsub.s32 32, %v85
  %v87 = vshrl.u32 683565275, %v86
  %v88 = vshll.u32 683565275, %v85
  %v89 = vshrl.u32 2475754826, %v86
  %v90 = vor.u32 %v88, %v89
  %v91 = vshll.u32 2475754826, %v85
  %v92 = vshrl.u32 2131351028, %v86
  %v93 = vor.u32 %v91, %v92
  %v94 = vshll.u32 2131351028, %v85
  %v95 = vshrl.u32 2102212464, %v86
  %v96 = vor.u32 %v94, %v95
  %v97 = vshll.u32 2102212464, %v85
  %v98 = vshrl.u32 920167782, %v86
  %v99 = vor.u32 %v97, %v98
  %v100 = vshll.u32 920167782, %v85
  %v101 = vshrl.u32 1326507024, %v86
  %v102 = vor.u32 %v100, %v101
  %vm103 = vcmp.lt.s32.totalorder %v84, 1
  %vm104 = vcmp.lt.s32.totalorder %v84, 2
  %vm105 = vcmp.lt.s32.totalorder %v84, 3
  %vm106 = vcmp.lt.s32.totalorder %v84, 4
  %v107 = vsel %vm103, %v87, %v90
  %v108 = vsel %vm106, %v96, 2102212464
  %v109 = vsel %vm105, %v93, %v108
  %v110 = vsel %vm104, %v107, %v109
  %v111 = vsel %vm103, %v90, %v93
  %v112 = vsel %vm106, %v99, 920167782
  %v113 = vsel %vm105, %v96, %v112
  %v114 = vsel %vm104, %v111, %v113
  %v115 = vsel %vm103, %v93, %v96
  %v116 = vsel %vm106, %v102, 1326507024
  %v117 = vsel %vm105, %v99, %v116
  %v118 = vsel %vm104, %v115, %v117
  %v119 = vshll.u32 %v79, 8
  %v120 = vmul.u32.u64.compose %v119, %v118
  %v121 = vextract.low.u32 %v120
  %v122 = vextract.high.u32 %v120
  %v123 = vmul.u32.u64.compose %v119, %v114
  %v124 = vextract.low.u32 %v123
  %v125 = vextract.high.u32 %v123
  %v126 = vmul.u32 %v119, %v110
  %v127 = vadd.s32 %v122, %v124
  %vm128 = vc.u32 %v122, %v124
  %v129 = vadd.s32 %v125, 1
  %v130 = vsel %vm128, %v129, %v125
  %v131 = vadd.s32 %v126, %v130
  %v132 = vadd.s32 %v131, 536870912
  %v133 = vshrl.u32 %v132, 30
  %v134 = vshll.u32 %v133, 30
  %v135 = vsub.s32 %v131, %v134
  %vm136 = vcmp.lt.s32.totalorder %v135, 0
  %v137 = vsub.s32 0, %v135
  %v138 = vsel %vm136, %v137, %v135
  %v139 = vclz %v138
  %v140 = vsub.s32 %v139, 2
  %vm141 = vcmp.gt.s32.totalorder 0, %v140
  %v142 = vsel %vm141, 0, %v140
  %v143 = vsub.s32 32, %v142
  %v144 = vshll.u32 %v135, %v142
  %v145 = vshrl.u32 %v127, %v143
  %v146 = vor.u32 %v144, %v145
  %v147 = vsub.s32 4294967266, %v142
  %v148 = vadd.s32 %v147, 127
  %v149 = vshll.u32 %v148, 23
  %v150 = vor.u32 4788187, %v149
  %v151 = vand.u32 2147483647, %v150
  %v153 = vcvt.s32.f32 %v146
  %v154 = vmul.f32 %v153, %v151
  %v155 = vxor.u32 %v154, 2147483648
  %v156 = vsel %vm73, %v155, %v154
  %v157 = vsub.s32 4, %v133
  %v158 = vsel %vm73, %v157, %v133
  %v159 = vsel %vm72, %v70, %v156
  %v160 = vsel %vm72, 0, %v158
  %v161 = vcosq.f32.pop %v159
  %v162 = vsinq.f32.pop %v159
  %vm163 = vweird.f32 %v70
  %v164 = vand.u32 %v160, 3
  %vm165 = vcmp.lt.s32.totalorder %v164, 2
  %vm166 = vcmp.eq.s32.totalorder %v164, 0
  %v167 = vxor.u32 %v162, 2147483648
  %v168 = vsel %vm166, %v161, %v167
  %vm169 = vcmp.eq.s32.totalorder %v164, 2
  %v170 = vxor.u32 %v161, 2147483648
  %v171 = vsel %vm169, %v170, %v162
  %v172 = vsel %vm165, %v168, %v171
  %v173 = vsel %vm163, nan, %v172
  %v174 = vmul.f32 %v69, %v173
  %v175 = vand.u32 2147483647, %v70
  %vm176 = vcmp.le.f32.partialorder %v175, 0.7853982
  %vm177 = vcmp.lt.s32.totalorder %v70, 0
  %v178 = vand.u32 %v70, 2139095040
  %v179 = vshrl.u32 %v178, 23
  %v180 = vsub.s32 %v179, 127
  %v181 = vand.u32 2147483647, %v70
  %v182 = vand.u32 %v181, 8388607
  %v183 = vor.u32 %v182, 8388608
  %v184 = vsub.s32 0, %v183
  %v185 = vadd.s32 %v180, 1
  %vm186 = vcmp.gt.s32.totalorder %v185, 0
  %v187 = vsel %vm186, %v185, 0
  %v188 = vshrl.u32 %v187, 5
  %v189 = vand.u32 %v187, 31
  %v190 = vsub.s32 32, %v189
  %v191 = vshrl.u32 683565275, %v190
  %v192 = vshll.u32 683565275, %v189
  %v193 = vshrl.u32 2475754826, %v190
  %v194 = vor.u32 %v192, %v193
  %v195 = vshll.u32 2475754826, %v189
  %v196 = vshrl.u32 2131351028, %v190
  %v197 = vor.u32 %v195, %v196
  %v198 = vshll.u32 2131351028, %v189
  %v199 = vshrl.u32 2102212464, %v190
  %v200 = vor.u32 %v198, %v199
  %v201 = vshll.u32 2102212464, %v189
  %v202 = vshrl.u32 920167782, %v190
  %v203 = vor.u32 %v201, %v202
  %v204 = vshll.u32 920167782, %v189
  %v205 = vshrl.u32 1326507024, %v190
  %v206 = vor.u32 %v204, %v205
  %vm207 = vcmp.lt.s32.totalorder %v188, 1
  %vm208 = vcmp.lt.s32.totalorder %v188, 2
  %vm209 = vcmp.lt.s32.totalorder %v188, 3
  %vm210 = vcmp.lt.s32.totalorder %v188, 4
  %v211 = vsel %vm207, %v191, %v194
  %v212 = vsel %vm210, %v200, 2102212464
  %v213 = vsel %vm209, %v197, %v212
  %v214 = vsel %vm208, %v211, %v213
  %v215 = vsel %vm207, %v194, %v197
  %v216 = vsel %vm210, %v203, 920167782
  %v217 = vsel %vm209, %v200, %v216
  %v218 = vsel %vm208, %v215, %v217
  %v219 = vsel %vm207, %v197, %v200
  %v220 = vsel %vm210, %v206, 1326507024
  %v221 = vsel %vm209, %v203, %v220
  %v222 = vsel %vm208, %v219, %v221
  %v223 = vshll.u32 %v183, 8
  %v224 = vmul.u32.u64.compose %v223, %v222
  %v225 = vextract.low.u32 %v224
  %v226 = vextract.high.u32 %v224
  %v227 = vmul.u32.u64.compose %v223, %v218
  %v228 = vextract.low.u32 %v227
  %v229 = vextract.high.u32 %v227
  %v230 = vmul.u32 %v223, %v214
  %v231 = vadd.s32 %v226, %v228
  %vm232 = vc.u32 %v226, %v228
  %v233 = vadd.s32 %v229, 1
  %v234 = vsel %vm232, %v233, %v229
  %v235 = vadd.s32 %v230, %v234
  %v236 = vadd.s32 %v235, 536870912
  %v237 = vshrl.u32 %v236, 30
  %v238 = vshll.u32 %v237, 30
  %v239 = vsub.s32 %v235, %v238
  %vm240 = vcmp.lt.s32.totalorder %v239, 0
  %v241 = vsub.s32 0, %v239
  %v242 = vsel %vm240, %v241, %v239
  %v243 = vclz %v242
  %v244 = vsub.s32 %v243, 2
  %vm245 = vcmp.gt.s32.totalorder 0, %v244
  %v246 = vsel %vm245, 0, %v244
  %v247 = vsub.s32 32, %v246
  %v248 = vshll.u32 %v239, %v246
  %v249 = vshrl.u32 %v231, %v247
  %v250 = vor.u32 %v248, %v249
  %v251 = vsub.s32 4294967266, %v246
  %v252 = vadd.s32 %v251, 127
  %v253 = vshll.u32 %v252, 23
  %v254 = vor.u32 4788187, %v253
  %v255 = vand.u32 2147483647, %v254
  %v257 = vcvt.s32.f32 %v250
  %v258 = vmul.f32 %v257, %v255
  %v259 = vxor.u32 %v258, 2147483648
  %v260 = vsel %vm177, %v259, %v258
  %v261 = vsub.s32 4, %v237
  %v262 = vsel %vm177, %v261, %v237
  %v263 = vsel %vm176, %v70, %v260
  %v264 = vsel %vm176, 0, %v262
  %v265 = vcosq.f32.pop %v263
  %v266 = vsinq.f32.pop %v263
  %vm267 = vweird.f32 %v70
  %v268 = vadd.s32 %v264, 3
  %v269 = vand.u32 %v268, 3
  %vm270 = vcmp.lt.s32.totalorder %v269, 2
  %vm271 = vcmp.eq.s32.totalorder %v269, 0
  %v272 = vxor.u32 %v266, 2147483648
  %v273 = vsel %vm271, %v265, %v272
  %vm274 = vcmp.eq.s32.totalorder %v269, 2
  %v275 = vxor.u32 %v265, 2147483648
  %v276 = vsel %vm274, %v275, %v266
  %v277 = vsel %vm270, %v273, %v276
  %v278 = vsel %vm267, nan, %v277
  %v279 = vmul.f32 %v69, %v278
  %v280 = vld [vmem:[%s3] sm:$0xff]
  %v281 = vld [vmem:[%s3 + $0x8] sm:$0xff]
  %v282 = vstv %s21
  %v283 = vmul.f32 %v174, %v282
  %v284 = vmul.f32 %v279, %v282
  %v285 = vadd.f32 %v280, %v283
  %v286 = vadd.f32 %v281, %v284
  %v287 = vstv %s20
  %v288 = vadd.f32 %v285, %v287
  %v289 = vadd.f32 %v286, %v287
  %v290 = vmax.f32 %v288, 0.0
  %v291 = vmax.f32 %v289, 0.0
  %v292 = vmin.f32 %v290, 1.0
  %v293 = vmin.f32 %v291, 1.0
  %294 = vst [vmem:[%s4] sm:$0xff] %v292
  %295 = vst [vmem:[%s4 + $0x8] sm:$0xff] %v293
  // Predicated region
  $region18: #{gaussian_noise.1} parent=0 // pred_check
    _
  $region19: #{gaussian_noise.1} parent=0 // pred_check_branch
    %297 = sbr.rel (0) target = $region21
  $region20: #{gaussian_noise.1} parent=0 // pred_region
    _
  $region21: #{gaussian_noise.1} parent=0 // pred_fallthru
    _
  // Predicated region
  $region22: #{gaussian_noise.1} parent=0 // pred_check
    _
  $region23: #{gaussian_noise.1} parent=0 // pred_check_branch
    %299 = sbr.rel (0) target = $region25
  $region24: #{gaussian_noise.1} parent=0 // pred_region
    _
  $region25: #{gaussian_noise.1} parent=0 // pred_fallthru
    _

</llo_original>
